<compile_context>
chip_gen: v7x
topology: tpu7x:2x2x1
jax: 0.10.0
libtpu: 0.0.40
codegen_flags: <defaults>
</compile_context>

<pallas_src>
import jax
import jax.numpy as jnp
from jax.experimental import pallas as pl
from jax.experimental.pallas import tpu as pltpu

LANE = 128
SUBLANE = 8


def _round_up(x, m):
    return ((x + m - 1) // m) * m


def _pad_to(a, shape):
    return jnp.pad(a, [(0, s - d) for d, s in zip(a.shape, shape)])


def _make_realnvp_kernel(hn_pad, resident):
    HN = hn_pad  # padded half-width (multiple of 128)

    def kernel(xa_ref, xb_ref, c_ref,
               w1_ref, b1_ref, w2_ref, b2_ref, wst_ref, bst_ref,
               xa_out_ref, xb_out_ref, ld_out_ref,
               xac_buf):
        j = pl.program_id(1)            # flow axis (inner, "arbitrary")
        widx = j if resident else 0     # resident: whole stack in VMEM, pick flow j

        # Seed the carried state in the output blocks.  Their index_map is
        # constant over j, so they stay VMEM-resident across the flow loop
        # (standard accumulator pattern); written back to HBM once per tile.
        @pl.when(j == 0)
        def _():
            xa_out_ref[...] = xa_ref[...]
            xb_out_ref[...] = xb_ref[...]
            ld_out_ref[...] = jnp.zeros_like(ld_out_ref)
            # Condition lanes of the fused fc1 operand, written once per batch
            # tile (lane-aligned: HN is a multiple of 128).
            xac_buf[:, HN:] = c_ref[...]

        first = xa_out_ref[...]    # current x_a  (f32)
        second = xb_out_ref[...]   # current x_b  (f32)

        # --- conditioner MLP ---------------------------------------------
        # fc1: single K = HN+HC contraction on the fused [x_a | c] buffer.
        xac_buf[:, :HN] = first.astype(jnp.bfloat16)
        h1 = jnp.dot(xac_buf[...], w1_ref[widx],
                     preferred_element_type=jnp.float32) + b1_ref[widx]
        h1 = jnp.maximum(h1, 0.0)
        h2 = jnp.dot(h1.astype(jnp.bfloat16), w2_ref[widx],
                     preferred_element_type=jnp.float32) + b2_ref[widx]
        h2 = jnp.maximum(h2, 0.0)
        # fused s|t head; split at the lane-aligned offset HN (multiple of 128)
        st = jnp.dot(h2.astype(jnp.bfloat16), wst_ref[widx],
                     preferred_element_type=jnp.float32) + bst_ref[widx]
        s = jnp.tanh(st[:, :HN])
        t = st[:, HN:]

        # --- coupling update + swap:  x <- [exp(s)*x_b + t, x_a] -----------
        xa_out_ref[...] = jnp.exp(s) * second + t
        xb_out_ref[...] = first
        ld_out_ref[...] = ld_out_ref[...] + s

    return kernel


def conditional_realnvp_forward(x, c, params, *, tb_target=512,
                                weight_resident_budget=24 << 20):
    """params: dict of stacked raw (PyTorch-shaped, transposed) weights."""
    B, data_dim = x.shape
    assert data_dim % 2 == 0
    n_half = data_dim // 2
    cond_dim = c.shape[1]
    n_flows, n_in, n_hidden = params["w1"].shape
    assert n_in == n_half + cond_dim

    HN = _round_up(n_half, LANE)
    HC = _round_up(cond_dim, LANE)
    HH = _round_up(n_hidden, LANE)

    # --- batch tiling: big tiles set arithmetic intensity; >=2 tiles (when
    # the batch allows) populate the v7x 2-TensorCore "parallel" axis. -------
    Bp = _round_up(B, SUBLANE)
    if Bp <= tb_target:
        TB = Bp
    elif Bp <= 2 * tb_target:
        TB = _round_up((Bp + 1) // 2, SUBLANE)
        Bp = 2 * TB
    else:
        TB = tb_target
        Bp = _round_up(Bp, TB)
    n_btiles = Bp // TB

    # --- host-side parameter prep: fuse W1 halves (K = HN+HC), pad lanes,
    #     fuse s/t heads, bf16 MXU operands, f32 biases ----------------------
    w1 = params["w1"]
    w1a = _pad_to(w1[:, :n_half, :], (n_flows, HN, HH))
    w1c = _pad_to(w1[:, n_half:, :], (n_flows, HC, HH))
    w1f = jnp.concatenate([w1a, w1c], axis=1).astype(jnp.bfloat16)   # (F, HN+HC, HH)
    b1 = _pad_to(params["b1"], (n_flows, 1, HH)).astype(jnp.float32)
    w2 = _pad_to(params["w2"], (n_flows, HH, HH)).astype(jnp.bfloat16)
    b2 = _pad_to(params["b2"], (n_flows, 1, HH)).astype(jnp.float32)
    ws = _pad_to(params["w3_s"], (n_flows, HH, HN))
    wt = _pad_to(params["w3_t"], (n_flows, HH, HN))
    wst = jnp.concatenate([ws, wt], axis=-1).astype(jnp.bfloat16)    # (F, HH, 2HN)
    bs = _pad_to(params["b3_s"], (n_flows, 1, HN))
    bt = _pad_to(params["b3_t"], (n_flows, 1, HN))
    bst = jnp.concatenate([bs, bt], axis=-1).astype(jnp.float32)

    # --- activations: split halves on the host, pad batch & lane dims -------
    xa = _pad_to(x[:, :n_half].astype(jnp.float32), (Bp, HN))
    xb = _pad_to(x[:, n_half:].astype(jnp.float32), (Bp, HN))
    cp = _pad_to(c.astype(jnp.float32), (Bp, HC)).astype(jnp.bfloat16)

    # --- VMEM budget: keep the whole stacked weight set resident when it fits;
    #     otherwise stream one flow's weights per grid step (double-buffered).
    per_flow_w = 2 * ((HN + HC) * HH + HH * HH + HH * 2 * HN)    # bf16 matrices
    per_flow_b = 4 * (HH + HH + 2 * HN)                          # f32 biases
    weight_bytes = n_flows * (per_flow_w + per_flow_b)
    resident = weight_bytes <= weight_resident_budget

    act_bytes = 2 * (4 * TB * 2 * HN + 2 * TB * HC)      # double-buffered xa/xb/c
    out_bytes = 2 * (4 * TB * 3 * HN)                    # resident outputs + writeback
    scratch_bytes = 2 * TB * (HN + HC)                   # fused fc1 operand (bf16)
    interm_bytes = 4 * TB * (2 * HH + 2 * HN) * 2        # h1/h2/st f32 + slack
    w_vmem = weight_bytes if resident else 2 * (per_flow_w + per_flow_b)
    vmem_limit = int(min(max(w_vmem + act_bytes + out_bytes + scratch_bytes
                             + interm_bytes + (8 << 20), 32 << 20), 64 << 20))

    kernel = _make_realnvp_kernel(HN, resident)

    def batch_spec(width):
        return pl.BlockSpec((TB, width), lambda b, j: (b, 0))

    def weight_spec(rows, cols):
        if resident:
            # Full-extent block, constant index -> DMA'd from HBM exactly once.
            return pl.BlockSpec((n_flows, rows, cols), lambda b, j: (0, 0, 0))
        # Streamed fallback: one flow's weights per step (auto double-buffered).
        return pl.BlockSpec((1, rows, cols), lambda b, j: (j, 0, 0))

    grid_spec = pltpu.PrefetchScalarGridSpec(
        num_scalar_prefetch=0,
        grid=(n_btiles, n_flows),
        in_specs=[
            batch_spec(HN),              # x_a0 (f32)
            batch_spec(HN),              # x_b0 (f32)
            batch_spec(HC),              # c (bf16)
            weight_spec(HN + HC, HH),    # fused W1
            weight_spec(1, HH),          # b1
            weight_spec(HH, HH),         # W2
            weight_spec(1, HH),          # b2
            weight_spec(HH, 2 * HN),     # fused W_s|t
            weight_spec(1, 2 * HN),      # fused b_s|t
        ],
        out_specs=[
            pl.BlockSpec((TB, HN), lambda b, j: (b, 0)),   # x_a (first half)
            pl.BlockSpec((TB, HN), lambda b, j: (b, 0)),   # x_b (second half)
            pl.BlockSpec((TB, HN), lambda b, j: (b, 0)),   # per-feature log-det
        ],
        scratch_shapes=[
            pltpu.VMEM((TB, HN + HC), jnp.bfloat16),       # fused fc1 operand [x_a | c]
        ],
    )

    out_shapes = (
        jax.ShapeDtypeStruct((Bp, HN), jnp.float32),
        jax.ShapeDtypeStruct((Bp, HN), jnp.float32),
        jax.ShapeDtypeStruct((Bp, HN), jnp.float32),
    )

    xa_out, xb_out, ld_out = pl.pallas_call(
        kernel,
        out_shape=out_shapes,
        grid_spec=grid_spec,
        compiler_params=pltpu.CompilerParams(
            dimension_semantics=("parallel", "arbitrary"),
            vmem_limit_bytes=vmem_limit),
    )(xa, xb, cp, w1f, b1, w2, b2, wst, bst)

    x_out = jnp.concatenate([xa_out[:B, :n_half], xb_out[:B, :n_half]], axis=1)
    log_det = ld_out[:B, :n_half]   # per-feature, matching the PyTorch module
    return x_out, log_det


def init_params(key, n_flows, n_half, cond_dim, n_hidden):
    """Deterministic synthetic parameters (PyTorch Linear shapes, stored
    transposed so the math is x @ W)."""
    n_in = n_half + cond_dim
    ks = jax.random.split(key, 8)
    scale = 0.2
    return {
        "w1":   scale * jax.random.normal(ks[0], (n_flows, n_in, n_hidden), jnp.float32),
        "b1":   scale * jax.random.normal(ks[1], (n_flows, 1, n_hidden), jnp.float32),
        "w2":   scale * jax.random.normal(ks[2], (n_flows, n_hidden, n_hidden), jnp.float32),
        "b2":   scale * jax.random.normal(ks[3], (n_flows, 1, n_hidden), jnp.float32),
        "w3_s": scale * jax.random.normal(ks[4], (n_flows, n_hidden, n_half), jnp.float32),
        "b3_s": scale * jax.random.normal(ks[5], (n_flows, 1, n_half), jnp.float32),
        "w3_t": scale * jax.random.normal(ks[6], (n_flows, n_hidden, n_half), jnp.float32),
        "b3_t": scale * jax.random.normal(ks[7], (n_flows, 1, n_half), jnp.float32),
    }


def reference_forward(x, c, params, n_half, matmul_dtype=jnp.float32):
    """Pure-JAX reference matching the PyTorch module semantics.

    `matmul_dtype=jnp.bfloat16` mimics the kernel's MXU precision (bf16
    operands, f32 accumulation); elementwise math stays f32 in both.
    """
    n_flows = params["w1"].shape[0]
    cast = lambda a: a.astype(matmul_dtype)
    x = x.astype(jnp.float32)
    c32 = c.astype(jnp.float32)
    log_det = jnp.zeros((x.shape[0], n_half), jnp.float32)
    for k in range(n_flows):
        x_a = x[:, :n_half]
        x_b = x[:, n_half:]
        x_a_c = jnp.concatenate([x_a, c32], axis=1)
        h = jax.nn.relu(jnp.dot(cast(x_a_c), cast(params["w1"][k]),
                                preferred_element_type=jnp.float32) + params["b1"][k])
        h = jax.nn.relu(jnp.dot(cast(h), cast(params["w2"][k]),
                                preferred_element_type=jnp.float32) + params["b2"][k])
        s = jnp.tanh(jnp.dot(cast(h), cast(params["w3_s"][k]),
                             preferred_element_type=jnp.float32) + params["b3_s"][k])
        t = jnp.dot(cast(h), cast(params["w3_t"][k]),
                    preferred_element_type=jnp.float32) + params["b3_t"][k]
        x_b = jnp.exp(s) * x_b + t
        x = jnp.concatenate([x_b, x_a], axis=1)
        log_det = log_det + s
    return x, log_det


if __name__ == "__main__":
    # Small shapes consistent with the module: x:[B,data_dim], c:[B,cond_dim].
    B = 8
    data_dim = 8
    cond_dim = 4
    n_hidden = 32
    n_flows = 4
    n_half = data_dim // 2

    key = jax.random.PRNGKey(0)
    kx, kc, kp = jax.random.split(key, 3)
    x = jax.random.normal(kx, (B, data_dim), jnp.float32)
    c = jax.random.normal(kc, (B, cond_dim), jnp.float32)
    params = init_params(kp, n_flows, n_half, cond_dim, n_hidden)

    x_out, log_det = conditional_realnvp_forward(x, c, params)
    x_out = jax.block_until_ready(x_out)
    log_det = jax.block_until_ready(log_det)

    # Primary check: reference with the same MXU precision as the kernel
    # (bf16 operands, f32 accumulation).
    x_ref, ld_ref = reference_forward(x, c, params, n_half,
                                      matmul_dtype=jnp.bfloat16)
    assert jnp.allclose(x_out, x_ref, atol=1e-3, rtol=1e-3)
    assert jnp.allclose(log_det, ld_ref, atol=1e-3, rtol=1e-3)

    # Sanity check against the full-f32 reference (looser tolerance, since the
    # kernel's bf16 matmul error compounds through exp(s) over the flow stack).
    x_ref32, ld_ref32 = reference_forward(x, c, params, n_half,
                                          matmul_dtype=jnp.float32)
    assert jnp.allclose(x_out, x_ref32, atol=5e-2, rtol=5e-2)
    assert jnp.allclose(log_det, ld_ref32, atol=5e-2, rtol=5e-2)

    print("KERNEL_OK")
</pallas_src>

<mosaic_0001>
module attributes {stable_mosaic.version = 11 : i64} {
  func.func @kernel(%arg0: i32, %arg1: i32, %arg2: memref<8x128xf32, #tpu.memory_space<vmem>>, %arg3: memref<8x128xf32, #tpu.memory_space<vmem>>, %arg4: memref<8x128xbf16, #tpu.memory_space<vmem>>, %arg5: memref<4x256x128xbf16, #tpu.memory_space<vmem>>, %arg6: memref<4x1x128xf32, #tpu.memory_space<vmem>>, %arg7: memref<4x128x128xbf16, #tpu.memory_space<vmem>>, %arg8: memref<4x1x128xf32, #tpu.memory_space<vmem>>, %arg9: memref<4x128x256xbf16, #tpu.memory_space<vmem>>, %arg10: memref<4x1x256xf32, #tpu.memory_space<vmem>>, %arg11: memref<8x128xf32, #tpu.memory_space<vmem>>, %arg12: memref<8x128xf32, #tpu.memory_space<vmem>>, %arg13: memref<8x128xf32, #tpu.memory_space<vmem>>, %arg14: memref<8x256xbf16, #tpu.memory_space<vmem>>) attributes {dimension_semantics = [#tpu.dimension_semantics<parallel>, #tpu.dimension_semantics<arbitrary>], iteration_bounds = array<i64: 1, 4>, scalar_prefetch = 0 : i64, scratch_operands = 1 : i64, tpu.core_type = #tpu.core_type<tc>, window_params = [{transform_indices = @transform_0, window_bounds = array<i64: 8, 128>}, {transform_indices = @transform_1, window_bounds = array<i64: 8, 128>}, {transform_indices = @transform_2, window_bounds = array<i64: 8, 128>}, {pipeline_mode = #tpu.pipeline_mode<synchronous>, transform_indices = @transform_3, window_bounds = array<i64: 4, 256, 128>}, {pipeline_mode = #tpu.pipeline_mode<synchronous>, transform_indices = @transform_4, window_bounds = array<i64: 4, 1, 128>}, {pipeline_mode = #tpu.pipeline_mode<synchronous>, transform_indices = @transform_5, window_bounds = array<i64: 4, 128, 128>}, {pipeline_mode = #tpu.pipeline_mode<synchronous>, transform_indices = @transform_6, window_bounds = array<i64: 4, 1, 128>}, {pipeline_mode = #tpu.pipeline_mode<synchronous>, transform_indices = @transform_7, window_bounds = array<i64: 4, 128, 256>}, {pipeline_mode = #tpu.pipeline_mode<synchronous>, transform_indices = @transform_8, window_bounds = array<i64: 4, 1, 256>}, {transform_indices = @transform_9, window_bounds = array<i64: 8, 128>}, {transform_indices = @transform_10, window_bounds = array<i64: 8, 128>}, {transform_indices = @transform_11, window_bounds = array<i64: 8, 128>}]} {
    %c0_i32 = arith.constant 0 : i32
    %0 = arith.cmpi eq, %arg1, %c0_i32 : i32
    %1 = arith.extui %0 : i1 to i32
    %c0_i32_0 = arith.constant 0 : i32
    %2 = arith.cmpi ne, %1, %c0_i32_0 : i32
    scf.if %2 {
      %c0_32 = arith.constant 0 : index
      %c0_33 = arith.constant 0 : index
      %52 = vector.load %arg2[%c0_32, %c0_33] : memref<8x128xf32, #tpu.memory_space<vmem>>, vector<8x128xf32>
      %c0_34 = arith.constant 0 : index
      %c0_35 = arith.constant 0 : index
      %53 = vector.load %arg11[%c0_34, %c0_35] : memref<8x128xf32, #tpu.memory_space<vmem>>, vector<8x128xf32>
      tpu.vector_store %arg11[%c0_34, %c0_35], %52 {strides = array<i32>} : memref<8x128xf32, #tpu.memory_space<vmem>>, vector<8x128xf32>,
      %c0_36 = arith.constant 0 : index
      %c0_37 = arith.constant 0 : index
      %54 = vector.load %arg3[%c0_36, %c0_37] : memref<8x128xf32, #tpu.memory_space<vmem>>, vector<8x128xf32>
      %c0_38 = arith.constant 0 : index
      %c0_39 = arith.constant 0 : index
      %55 = vector.load %arg12[%c0_38, %c0_39] : memref<8x128xf32, #tpu.memory_space<vmem>>, vector<8x128xf32>
      tpu.vector_store %arg12[%c0_38, %c0_39], %54 {strides = array<i32>} : memref<8x128xf32, #tpu.memory_space<vmem>>, vector<8x128xf32>,
      %cst_40 = arith.constant 0.000000e+00 : f32
      %56 = vector.broadcast %cst_40 : f32 to vector<8x128xf32>
      %c0_41 = arith.constant 0 : index
      %c0_42 = arith.constant 0 : index
      %57 = vector.load %arg13[%c0_41, %c0_42] : memref<8x128xf32, #tpu.memory_space<vmem>>, vector<8x128xf32>
      tpu.vector_store %arg13[%c0_41, %c0_42], %56 {strides = array<i32>} : memref<8x128xf32, #tpu.memory_space<vmem>>, vector<8x128xf32>,
      %c0_43 = arith.constant 0 : index
      %c0_44 = arith.constant 0 : index
      %58 = vector.load %arg4[%c0_43, %c0_44] : memref<8x128xbf16, #tpu.memory_space<vmem>>, vector<8x128xbf16>
      %c0_45 = arith.constant 0 : index
      %c128 = arith.constant 128 : index
      %59 = vector.load %arg14[%c0_45, %c128] : memref<8x256xbf16, #tpu.memory_space<vmem>>, vector<8x128xbf16>
      tpu.vector_store %arg14[%c0_45, %c128], %58 {strides = array<i32>} : memref<8x256xbf16, #tpu.memory_space<vmem>>, vector<8x128xbf16>,
    } else {
    }
    %c0 = arith.constant 0 : index
    %c0_1 = arith.constant 0 : index
    %3 = vector.load %arg11[%c0, %c0_1] : memref<8x128xf32, #tpu.memory_space<vmem>>, vector<8x128xf32>
    %c0_2 = arith.constant 0 : index
    %c0_3 = arith.constant 0 : index
    %4 = vector.load %arg12[%c0_2, %c0_3] : memref<8x128xf32, #tpu.memory_space<vmem>>, vector<8x128xf32>
    %5 = arith.truncf %3 : vector<8x128xf32> to vector<8x128xbf16>
    %c0_4 = arith.constant 0 : index
    %c0_5 = arith.constant 0 : index
    %6 = vector.load %arg14[%c0_4, %c0_5] : memref<8x256xbf16, #tpu.memory_space<vmem>>, vector<8x128xbf16>
    tpu.vector_store %arg14[%c0_4, %c0_5], %5 {strides = array<i32>} : memref<8x256xbf16, #tpu.memory_space<vmem>>, vector<8x128xbf16>,
    %c0_6 = arith.constant 0 : index
    %c0_7 = arith.constant 0 : index
    %7 = vector.load %arg14[%c0_6, %c0_7] : memref<8x256xbf16, #tpu.memory_space<vmem>>, vector<8x256xbf16>
    %8 = arith.index_cast %arg1 : i32 to index
    %c0_8 = arith.constant 0 : index
    %c0_9 = arith.constant 0 : index
    %9 = vector.load %arg5[%8, %c0_8, %c0_9] : memref<4x256x128xbf16, #tpu.memory_space<vmem>>, vector<1x256x128xbf16>
    %10 = vector.shape_cast %9 : vector<1x256x128xbf16> to vector<256x128xbf16>
    %cst = arith.constant dense<0.000000e+00> : vector<8x128xf32>
    %11 = tpu.matmul %7, %10, %cst {dimension_numbers = #tpu.dot_dimension_numbers<[1], [0], [0], [1], [0, 0, 1, 1], [], []>} : vector<8x256xbf16>, vector<256x128xbf16>, vector<8x128xf32> -> vector<8x128xf32>
    %12 = arith.index_cast %arg1 : i32 to index
    %c0_10 = arith.constant 0 : index
    %c0_11 = arith.constant 0 : index
    %13 = vector.load %arg6[%12, %c0_10, %c0_11] : memref<4x1x128xf32, #tpu.memory_space<vmem>>, vector<1x1x128xf32>
    %14 = vector.shape_cast %13 : vector<1x1x128xf32> to vector<1x128xf32>
    %15 = vector.broadcast %14 : vector<1x128xf32> to vector<8x128xf32>
    %16 = arith.addf %11, %15 : vector<8x128xf32>
    %cst_12 = arith.constant 0.000000e+00 : f32
    %17 = vector.broadcast %cst_12 : f32 to vector<8x128xf32>
    %18 = arith.maximumf %16, %17 : vector<8x128xf32>
    %19 = arith.truncf %18 : vector<8x128xf32> to vector<8x128xbf16>
    %20 = arith.index_cast %arg1 : i32 to index
    %c0_13 = arith.constant 0 : index
    %c0_14 = arith.constant 0 : index
    %21 = vector.load %arg7[%20, %c0_13, %c0_14] : memref<4x128x128xbf16, #tpu.memory_space<vmem>>, vector<1x128x128xbf16>
    %22 = vector.shape_cast %21 : vector<1x128x128xbf16> to vector<128x128xbf16>
    %cst_15 = arith.constant dense<0.000000e+00> : vector<8x128xf32>
    %23 = tpu.matmul %19, %22, %cst_15 {dimension_numbers = #tpu.dot_dimension_numbers<[1], [0], [0], [1], [0, 0, 1, 1], [], []>} : vector<8x128xbf16>, vector<128x128xbf16>, vector<8x128xf32> -> vector<8x128xf32>
    %24 = arith.index_cast %arg1 : i32 to index
    %c0_16 = arith.constant 0 : index
    %c0_17 = arith.constant 0 : index
    %25 = vector.load %arg8[%24, %c0_16, %c0_17] : memref<4x1x128xf32, #tpu.memory_space<vmem>>, vector<1x1x128xf32>
    %26 = vector.shape_cast %25 : vector<1x1x128xf32> to vector<1x128xf32>
    %27 = vector.broadcast %26 : vector<1x128xf32> to vector<8x128xf32>
    %28 = arith.addf %23, %27 : vector<8x128xf32>
    %cst_18 = arith.constant 0.000000e+00 : f32
    %29 = vector.broadcast %cst_18 : f32 to vector<8x128xf32>
    %30 = arith.maximumf %28, %29 : vector<8x128xf32>
    %31 = arith.truncf %30 : vector<8x128xf32> to vector<8x128xbf16>
    %32 = arith.index_cast %arg1 : i32 to index
    %c0_19 = arith.constant 0 : index
    %c0_20 = arith.constant 0 : index
    %33 = vector.load %arg9[%32, %c0_19, %c0_20] : memref<4x128x256xbf16, #tpu.memory_space<vmem>>, vector<1x128x256xbf16>
    %34 = vector.shape_cast %33 : vector<1x128x256xbf16> to vector<128x256xbf16>
    %cst_21 = arith.constant dense<0.000000e+00> : vector<8x256xf32>
    %35 = tpu.matmul %31, %34, %cst_21 {dimension_numbers = #tpu.dot_dimension_numbers<[1], [0], [0], [1], [0, 0, 1, 1], [], []>} : vector<8x128xbf16>, vector<128x256xbf16>, vector<8x256xf32> -> vector<8x256xf32>
    %36 = arith.index_cast %arg1 : i32 to index
    %c0_22 = arith.constant 0 : index
    %c0_23 = arith.constant 0 : index
    %37 = vector.load %arg10[%36, %c0_22, %c0_23] : memref<4x1x256xf32, #tpu.memory_space<vmem>>, vector<1x1x256xf32>
    %38 = vector.shape_cast %37 : vector<1x1x256xf32> to vector<1x256xf32>
    %39 = vector.broadcast %38 : vector<1x256xf32> to vector<8x256xf32>
    %40 = arith.addf %35, %39 : vector<8x256xf32>
    %41 = vector.extract_strided_slice %40 {offsets = [0, 0], sizes = [8, 128], strides = [1, 1]} : vector<8x256xf32> to vector<8x128xf32>
    %42 = math.tanh %41 : vector<8x128xf32>
    %43 = vector.extract_strided_slice %40 {offsets = [0, 128], sizes = [8, 128], strides = [1, 1]} : vector<8x256xf32> to vector<8x128xf32>
    %44 = math.exp %42 : vector<8x128xf32>
    %45 = arith.mulf %44, %4 : vector<8x128xf32>
    %46 = arith.addf %45, %43 : vector<8x128xf32>
    %c0_24 = arith.constant 0 : index
    %c0_25 = arith.constant 0 : index
    %47 = vector.load %arg11[%c0_24, %c0_25] : memref<8x128xf32, #tpu.memory_space<vmem>>, vector<8x128xf32>
    tpu.vector_store %arg11[%c0_24, %c0_25], %46 {strides = array<i32>} : memref<8x128xf32, #tpu.memory_space<vmem>>, vector<8x128xf32>,
    %c0_26 = arith.constant 0 : index
    %c0_27 = arith.constant 0 : index
    %48 = vector.load %arg12[%c0_26, %c0_27] : memref<8x128xf32, #tpu.memory_space<vmem>>, vector<8x128xf32>
    tpu.vector_store %arg12[%c0_26, %c0_27], %3 {strides = array<i32>} : memref<8x128xf32, #tpu.memory_space<vmem>>, vector<8x128xf32>,
    %c0_28 = arith.constant 0 : index
    %c0_29 = arith.constant 0 : index
    %49 = vector.load %arg13[%c0_28, %c0_29] : memref<8x128xf32, #tpu.memory_space<vmem>>, vector<8x128xf32>
    %50 = arith.addf %49, %42 : vector<8x128xf32>
    %c0_30 = arith.constant 0 : index
    %c0_31 = arith.constant 0 : index
    %51 = vector.load %arg13[%c0_30, %c0_31] : memref<8x128xf32, #tpu.memory_space<vmem>>, vector<8x128xf32>
    tpu.vector_store %arg13[%c0_30, %c0_31], %50 {strides = array<i32>} : memref<8x128xf32, #tpu.memory_space<vmem>>, vector<8x128xf32>,
    return
  }
  func.func @transform_0(%arg0: i32, %arg1: i32) -> (i32, i32) {
    %c0_i32 = arith.constant 0 : i32
    %c0_i32_0 = arith.constant 0 : i32
    return %arg0, %c0_i32 : i32, i32
  }
  func.func @transform_1(%arg0: i32, %arg1: i32) -> (i32, i32) {
    %c0_i32 = arith.constant 0 : i32
    %c0_i32_0 = arith.constant 0 : i32
    return %arg0, %c0_i32 : i32, i32
  }
  func.func @transform_2(%arg0: i32, %arg1: i32) -> (i32, i32) {
    %c0_i32 = arith.constant 0 : i32
    %c0_i32_0 = arith.constant 0 : i32
    return %arg0, %c0_i32 : i32, i32
  }
  func.func @transform_3(%arg0: i32, %arg1: i32) -> (i32, i32, i32) {
    %c0_i32 = arith.constant 0 : i32
    %c0_i32_0 = arith.constant 0 : i32
    %c0_i32_1 = arith.constant 0 : i32
    %c0_i32_2 = arith.constant 0 : i32
    return %c0_i32, %c0_i32_0, %c0_i32_1 : i32, i32, i32
  }
  func.func @transform_4(%arg0: i32, %arg1: i32) -> (i32, i32, i32) {
    %c0_i32 = arith.constant 0 : i32
    %c0_i32_0 = arith.constant 0 : i32
    %c0_i32_1 = arith.constant 0 : i32
    %c0_i32_2 = arith.constant 0 : i32
    return %c0_i32, %c0_i32_0, %c0_i32_1 : i32, i32, i32
  }
  func.func @transform_5(%arg0: i32, %arg1: i32) -> (i32, i32, i32) {
    %c0_i32 = arith.constant 0 : i32
    %c0_i32_0 = arith.constant 0 : i32
    %c0_i32_1 = arith.constant 0 : i32
    %c0_i32_2 = arith.constant 0 : i32
    return %c0_i32, %c0_i32_0, %c0_i32_1 : i32, i32, i32
  }
  func.func @transform_6(%arg0: i32, %arg1: i32) -> (i32, i32, i32) {
    %c0_i32 = arith.constant 0 : i32
    %c0_i32_0 = arith.constant 0 : i32
    %c0_i32_1 = arith.constant 0 : i32
    %c0_i32_2 = arith.constant 0 : i32
    return %c0_i32, %c0_i32_0, %c0_i32_1 : i32, i32, i32
  }
  func.func @transform_7(%arg0: i32, %arg1: i32) -> (i32, i32, i32) {
    %c0_i32 = arith.constant 0 : i32
    %c0_i32_0 = arith.constant 0 : i32
    %c0_i32_1 = arith.constant 0 : i32
    %c0_i32_2 = arith.constant 0 : i32
    return %c0_i32, %c0_i32_0, %c0_i32_1 : i32, i32, i32
  }
  func.func @transform_8(%arg0: i32, %arg1: i32) -> (i32, i32, i32) {
    %c0_i32 = arith.constant 0 : i32
    %c0_i32_0 = arith.constant 0 : i32
    %c0_i32_1 = arith.constant 0 : i32
    %c0_i32_2 = arith.constant 0 : i32
    return %c0_i32, %c0_i32_0, %c0_i32_1 : i32, i32, i32
  }
  func.func @transform_9(%arg0: i32, %arg1: i32) -> (i32, i32) {
    %c0_i32 = arith.constant 0 : i32
    %c0_i32_0 = arith.constant 0 : i32
    return %arg0, %c0_i32 : i32, i32
  }
  func.func @transform_10(%arg0: i32, %arg1: i32) -> (i32, i32) {
    %c0_i32 = arith.constant 0 : i32
    %c0_i32_0 = arith.constant 0 : i32
    return %arg0, %c0_i32 : i32, i32
  }
  func.func @transform_11(%arg0: i32, %arg1: i32) -> (i32, i32) {
    %c0_i32 = arith.constant 0 : i32
    %c0_i32_0 = arith.constant 0 : i32
    return %arg0, %c0_i32 : i32, i32
  }
}

</mosaic_0001>

<llo_original>
// kernel: tpu_custom_call.1
$region0: #{tpu_custom_call.1}
  #allocation0 [shape = 'u32[]', space=smem, size = 0x4, offset = 0x4, fixed_abs, tag = 'smem constant byte address 0x4 - core index']
  #allocation1 [shape = 'u32[144,128]{1,0:T(1,128)}', space=vmem, size = 0x12000, scoped, tag = 'internal scratch']
  #allocation2 [shape = 'bf16[8,256]{1,0:T(8,128)(2,1)}', space=vmem, size = 0x1000, scoped, tag = 'scratch operand']
  %s0 = inlined_call_operand.hbm [shape: f32[8,128], index: 0, kind: input, shape index: {}]
  %s1 = inlined_call_operand.hbm [shape: f32[8,128], index: 1, kind: input, shape index: {}]
  %s2 = inlined_call_operand.vmem [shape: bf16[8,128], index: 2, kind: input, shape index: {}]
  %s3 = inlined_call_operand.hbm [shape: bf16[4,256,128], index: 3, kind: input, shape index: {}]
  %s4 = inlined_call_operand.hbm [shape: f32[4,1,128], index: 4, kind: input, shape index: {}]
  %s5 = inlined_call_operand.hbm [shape: bf16[4,128,128], index: 5, kind: input, shape index: {}]
  %s6 = inlined_call_operand.vmem [shape: f32[4,1,128], index: 6, kind: input, shape index: {}]
  %s7 = inlined_call_operand.hbm [shape: bf16[4,128,256], index: 7, kind: input, shape index: {}]
  %s8 = inlined_call_operand.vmem [shape: f32[4,1,256], index: 8, kind: input, shape index: {}]
  %s9 = inlined_call_operand.hbm [shape: f32[8,128], index: 9, kind: output, shape index: {0}]
  %s10 = inlined_call_operand.hbm [shape: f32[8,128], index: 10, kind: output, shape index: {1}]
  %s11 = inlined_call_operand.hbm [shape: f32[8,128], index: 11, kind: output, shape index: {2}]
  %12 = xla_tuple %s9, %s10, %s11
  %s13 = sld [smem:[#allocation0]]
  $region113: #{tpu_custom_call.1} parent=0
    _
  %s15 = ssub.s32 1, %s13
  %s16 = scalar_select 0, %s15, %s13
  $region1: #{tpu_custom_call.1} parent=0
    #allocation3 [shape = 'u8[4096]{0}', space=vmem, size = 0x1000, scoped, tag = 'input window, operand 0, single buffered']
    #allocation4 [shape = 's32[2]{0}', space=sflag, size = 0x8, scoped, tag = 'scoped memory for tpu_custom_call.1']
    #allocation5 [shape = 's32[2]{0}', space=sflag, size = 0x8, scoped, tag = 'scoped memory for tpu_custom_call.1']
    #allocation6 [shape = 'u8[4096]{0}', space=vmem, size = 0x1000, scoped, tag = 'input window, operand 1, single buffered']
    #allocation7 [shape = 's32[1]{0}', space=sflag, size = 0x4, scoped, tag = 'scoped memory for tpu_custom_call.1']
    #allocation8 [shape = 'u8[262144]{0}', space=vmem, size = 0x40000, scoped, tag = 'input window, operand 3, single buffered']
    #allocation9 [shape = 'u8[2048]{0}', space=vmem, size = 0x800, scoped, tag = 'input window, operand 4, single buffered']
    #allocation10 [shape = 's32[1]{0}', space=sflag, size = 0x4, scoped, tag = 'scoped memory for tpu_custom_call.1']
    #allocation11 [shape = 'u8[131072]{0}', space=vmem, size = 0x20000, scoped, tag = 'input window, operand 5, single buffered']
    #allocation12 [shape = 'u8[262144]{0}', space=vmem, size = 0x40000, scoped, tag = 'input window, operand 7, single buffered']
    #allocation13 [shape = 's32[1]{0}', space=sflag, size = 0x4, scoped, tag = 'scoped memory for tpu_custom_call.1']
    #allocation14 [shape = 'u8[4096]{0}', space=vmem, size = 0x1000, scoped, tag = 'output window, operand 0, single buffered']
    #allocation15 [shape = 'u8[4096]{0}', space=vmem, size = 0x1000, scoped, tag = 'output window, operand 1, single buffered']
    #allocation16 [shape = 's32[1]{0}', space=sflag, size = 0x4, scoped, tag = 'scoped memory for tpu_custom_call.1']
    #allocation17 [shape = 'u8[4096]{0}', space=vmem, size = 0x1000, scoped, tag = 'output window, operand 2, single buffered']
    %17 = vsyncpa [#allocation4], 0
    %18 = vsyncpa [#allocation7], 0
    %19 = vsyncpa [#allocation10], 0
    %20 = vsyncpa [#allocation13], 0
    %21 = vsyncpa [#allocation5], 0
    %22 = vsyncpa [#allocation16], 0
    loop: start=0, step=1, limit=6
    $region2: #{tpu_custom_call.1} parent=1 // loop_pre_header
      _
    $region3: #{tpu_custom_call.1} parent=1 // loop_header
      %s24 = sphi 0, %s28
      %p25 = scmp.ge.s32.totalorder %s24, 6
      %s31 = sphi 0, %s43
      %s32 = sphi 0, %s39
      %s33 = sphi 0, %s31
      %s34 = sphi 0, %s32
      %s35 = sphi 0, %s33
      %s36 = sphi 0, %s34
      %s46 = sphi 0, %s48
      %s49 = sphi 0, %s46
      %s50 = sphi 0, %s49
      %s66 = sphi 0, %s50
      %s72 = sphi 0, %s74
      %s75 = sphi 0, %s72
      %s76 = sphi 0, %s75
      %s92 = sphi 0, %s76
      %s98 = sphi 0, %s100
      %s101 = sphi 0, %s98
      %s102 = sphi 0, %s101
      %s118 = sphi 0, %s102
      %s122 = sphi 0, %s122
      %s124 = sphi 0, %s122
      %s125 = sphi 0, %s124
      %s139 = sphi 0, %s125
      %s143 = sphi 0, %s143
      %s145 = sphi 0, %s143
      %s146 = sphi 0, %s145
      %s160 = sphi 0, %s146
      %s164 = sphi 0, %s164
      %s166 = sphi 0, %s164
      %s167 = sphi 0, %s166
      %s181 = sphi 0, %s167
      %s185 = sphi 0, %s185
      %s187 = sphi 0, %s185
      %s188 = sphi 0, %s187
      %s202 = sphi 0, %s188
      %s206 = sphi 0, %s206
      %s208 = sphi 0, %s206
      %s209 = sphi 0, %s208
      %s223 = sphi 0, %s209
      %s227 = sphi 0, %s227
      %s229 = sphi 0, %s227
      %s230 = sphi 0, %s229
      %s244 = sphi 0, %s230
      %s250 = sphi 0, %s252
      %s253 = sphi 0, %s250
      %s254 = sphi 0, %s253
      %s270 = sphi 0, %s254
      %s276 = sphi 0, %s278
      %s279 = sphi 0, %s276
      %s280 = sphi 0, %s279
      %s296 = sphi 0, %s280
      %s302 = sphi 0, %s304
      %s305 = sphi 0, %s302
      %s306 = sphi 0, %s305
      %s322 = sphi 0, %s306
    $region4: #{tpu_custom_call.1} parent=1 // loop_header_branch
      %27 = sbr.rel (%p25) target = $region8
    $region5: #{tpu_custom_call.1} parent=1 // loop_body
      %s29 = ssub.s32 %s24, 1
      %s30 = ssub.s32 %s24, 2
      %s37 = sadd.s32 1, %s32
      %p38 = scmp.ge.s32.totalorder %s37, 4
      %s39 = scalar_select %p38, 0, %s37
      %s40 = sadd.s32 1, %s31
      %s41 = scalar_select %p38, %s40, %s31
      %p42 = scmp.ge.s32.totalorder %s41, 1
      %s43 = scalar_select %p42, 0, %s41
      %s44 = ssub.s32 %s31, %s43
      %p45 = scmp.eq.s32.totalorder %s44, 0
      %s47 = sadd.s32 %s46, 1
      %s48 = scalar_select %p45, %s46, %s47
      %p51 = pneg %p45
      %p52 = scmp.eq.s32.totalorder %s24, 3
      %p53 = por %p51, %p52
      %p54 = scmp.ne.s32.totalorder %s46, %s49
      %p55 = scmp.eq.s32.totalorder %s24, 0
      %p56 = por %p54, %p55
      %p57 = scmp.ne.s32.totalorder %s46, %s49
      %p58 = scmp.eq.s32.totalorder %s29, 3
      %p59 = por %p57, %p58
      %p60 = scmp.ne.s32.totalorder %s49, %s50
      %p61 = scmp.eq.s32.totalorder %s29, 0
      %p62 = por %p60, %p61
      %p63 = scmp.ne.s32.totalorder %s49, %s50
      %p64 = scmp.eq.s32.totalorder %s30, 3
      %p65 = por %p63, %p64
      %p67 = scmp.ne.s32.totalorder %s50, %s66
      %p68 = scmp.eq.s32.totalorder %s30, 0
      %p69 = por %p67, %p68
      %s70 = ssub.s32 %s31, %s43
      %p71 = scmp.eq.s32.totalorder %s70, 0
      %s73 = sadd.s32 %s72, 1
      %s74 = scalar_select %p71, %s72, %s73
      %p77 = pneg %p71
      %p78 = scmp.eq.s32.totalorder %s24, 3
      %p79 = por %p77, %p78
      %p80 = scmp.ne.s32.totalorder %s72, %s75
      %p81 = scmp.eq.s32.totalorder %s24, 0
      %p82 = por %p80, %p81
      %p83 = scmp.ne.s32.totalorder %s72, %s75
      %p84 = scmp.eq.s32.totalorder %s29, 3
      %p85 = por %p83, %p84
      %p86 = scmp.ne.s32.totalorder %s75, %s76
      %p87 = scmp.eq.s32.totalorder %s29, 0
      %p88 = por %p86, %p87
      %p89 = scmp.ne.s32.totalorder %s75, %s76
      %p90 = scmp.eq.s32.totalorder %s30, 3
      %p91 = por %p89, %p90
      %p93 = scmp.ne.s32.totalorder %s76, %s92
      %p94 = scmp.eq.s32.totalorder %s30, 0
      %p95 = por %p93, %p94
      %s96 = ssub.s32 %s31, %s43
      %p97 = scmp.eq.s32.totalorder %s96, 0
      %s99 = sadd.s32 %s98, 1
      %s100 = scalar_select %p97, %s98, %s99
      %p103 = pneg %p97
      %p104 = scmp.eq.s32.totalorder %s24, 3
      %p105 = por %p103, %p104
      %p106 = scmp.ne.s32.totalorder %s98, %s101
      %p107 = scmp.eq.s32.totalorder %s24, 0
      %p108 = por %p106, %p107
      %p109 = scmp.ne.s32.totalorder %s98, %s101
      %p110 = scmp.eq.s32.totalorder %s29, 3
      %p111 = por %p109, %p110
      %p112 = scmp.ne.s32.totalorder %s101, %s102
      %p113 = scmp.eq.s32.totalorder %s29, 0
      %p114 = por %p112, %p113
      %p115 = scmp.ne.s32.totalorder %s101, %s102
      %p116 = scmp.eq.s32.totalorder %s30, 3
      %p117 = por %p115, %p116
      %p119 = scmp.ne.s32.totalorder %s102, %s118
      %p120 = scmp.eq.s32.totalorder %s30, 0
      %p121 = por %p119, %p120
      %s123 = sadd.s32 %s122, 1
      %p126 = scmp.eq.s32.totalorder %s24, 3
      %p127 = scmp.ne.s32.totalorder %s122, %s124
      %p128 = scmp.eq.s32.totalorder %s24, 0
      %p129 = por %p127, %p128
      %p130 = scmp.ne.s32.totalorder %s122, %s124
      %p131 = scmp.eq.s32.totalorder %s29, 3
      %p132 = por %p130, %p131
      %p133 = scmp.ne.s32.totalorder %s124, %s125
      %p134 = scmp.eq.s32.totalorder %s29, 0
      %p135 = por %p133, %p134
      %p136 = scmp.ne.s32.totalorder %s124, %s125
      %p137 = scmp.eq.s32.totalorder %s30, 3
      %p138 = por %p136, %p137
      %p140 = scmp.ne.s32.totalorder %s125, %s139
      %p141 = scmp.eq.s32.totalorder %s30, 0
      %p142 = por %p140, %p141
      %s144 = sadd.s32 %s143, 1
      %p147 = scmp.eq.s32.totalorder %s24, 3
      %p148 = scmp.ne.s32.totalorder %s143, %s145
      %p149 = scmp.eq.s32.totalorder %s24, 0
      %p150 = por %p148, %p149
      %p151 = scmp.ne.s32.totalorder %s143, %s145
      %p152 = scmp.eq.s32.totalorder %s29, 3
      %p153 = por %p151, %p152
      %p154 = scmp.ne.s32.totalorder %s145, %s146
      %p155 = scmp.eq.s32.totalorder %s29, 0
      %p156 = por %p154, %p155
      %p157 = scmp.ne.s32.totalorder %s145, %s146
      %p158 = scmp.eq.s32.totalorder %s30, 3
      %p159 = por %p157, %p158
      %p161 = scmp.ne.s32.totalorder %s146, %s160
      %p162 = scmp.eq.s32.totalorder %s30, 0
      %p163 = por %p161, %p162
      %s165 = sadd.s32 %s164, 1
      %p168 = scmp.eq.s32.totalorder %s24, 3
      %p169 = scmp.ne.s32.totalorder %s164, %s166
      %p170 = scmp.eq.s32.totalorder %s24, 0
      %p171 = por %p169, %p170
      %p172 = scmp.ne.s32.totalorder %s164, %s166
      %p173 = scmp.eq.s32.totalorder %s29, 3
      %p174 = por %p172, %p173
      %p175 = scmp.ne.s32.totalorder %s166, %s167
      %p176 = scmp.eq.s32.totalorder %s29, 0
      %p177 = por %p175, %p176
      %p178 = scmp.ne.s32.totalorder %s166, %s167
      %p179 = scmp.eq.s32.totalorder %s30, 3
      %p180 = por %p178, %p179
      %p182 = scmp.ne.s32.totalorder %s167, %s181
      %p183 = scmp.eq.s32.totalorder %s30, 0
      %p184 = por %p182, %p183
      %s186 = sadd.s32 %s185, 1
      %p189 = scmp.eq.s32.totalorder %s24, 3
      %p190 = scmp.ne.s32.totalorder %s185, %s187
      %p191 = scmp.eq.s32.totalorder %s24, 0
      %p192 = por %p190, %p191
      %p193 = scmp.ne.s32.totalorder %s185, %s187
      %p194 = scmp.eq.s32.totalorder %s29, 3
      %p195 = por %p193, %p194
      %p196 = scmp.ne.s32.totalorder %s187, %s188
      %p197 = scmp.eq.s32.totalorder %s29, 0
      %p198 = por %p196, %p197
      %p199 = scmp.ne.s32.totalorder %s187, %s188
      %p200 = scmp.eq.s32.totalorder %s30, 3
      %p201 = por %p199, %p200
      %p203 = scmp.ne.s32.totalorder %s188, %s202
      %p204 = scmp.eq.s32.totalorder %s30, 0
      %p205 = por %p203, %p204
      %s207 = sadd.s32 %s206, 1
      %p210 = scmp.eq.s32.totalorder %s24, 3
      %p211 = scmp.ne.s32.totalorder %s206, %s208
      %p212 = scmp.eq.s32.totalorder %s24, 0
      %p213 = por %p211, %p212
      %p214 = scmp.ne.s32.totalorder %s206, %s208
      %p215 = scmp.eq.s32.totalorder %s29, 3
      %p216 = por %p214, %p215
      %p217 = scmp.ne.s32.totalorder %s208, %s209
      %p218 = scmp.eq.s32.totalorder %s29, 0
      %p219 = por %p217, %p218
      %p220 = scmp.ne.s32.totalorder %s208, %s209
      %p221 = scmp.eq.s32.totalorder %s30, 3
      %p222 = por %p220, %p221
      %p224 = scmp.ne.s32.totalorder %s209, %s223
      %p225 = scmp.eq.s32.totalorder %s30, 0
      %p226 = por %p224, %p225
      %s228 = sadd.s32 %s227, 1
      %p231 = scmp.eq.s32.totalorder %s24, 3
      %p232 = scmp.ne.s32.totalorder %s227, %s229
      %p233 = scmp.eq.s32.totalorder %s24, 0
      %p234 = por %p232, %p233
      %p235 = scmp.ne.s32.totalorder %s227, %s229
      %p236 = scmp.eq.s32.totalorder %s29, 3
      %p237 = por %p235, %p236
      %p238 = scmp.ne.s32.totalorder %s229, %s230
      %p239 = scmp.eq.s32.totalorder %s29, 0
      %p240 = por %p238, %p239
      %p241 = scmp.ne.s32.totalorder %s229, %s230
      %p242 = scmp.eq.s32.totalorder %s30, 3
      %p243 = por %p241, %p242
      %p245 = scmp.ne.s32.totalorder %s230, %s244
      %p246 = scmp.eq.s32.totalorder %s30, 0
      %p247 = por %p245, %p246
      %s248 = ssub.s32 %s31, %s43
      %p249 = scmp.eq.s32.totalorder %s248, 0
      %s251 = sadd.s32 %s250, 1
      %s252 = scalar_select %p249, %s250, %s251
      %p255 = pneg %p249
      %p256 = scmp.eq.s32.totalorder %s24, 3
      %p257 = por %p255, %p256
      %p258 = scmp.ne.s32.totalorder %s250, %s253
      %p259 = scmp.eq.s32.totalorder %s24, 0
      %p260 = por %p258, %p259
      %p261 = scmp.ne.s32.totalorder %s250, %s253
      %p262 = scmp.eq.s32.totalorder %s29, 3
      %p263 = por %p261, %p262
      %p264 = scmp.ne.s32.totalorder %s253, %s254
      %p265 = scmp.eq.s32.totalorder %s29, 0
      %p266 = por %p264, %p265
      %p267 = scmp.ne.s32.totalorder %s253, %s254
      %p268 = scmp.eq.s32.totalorder %s30, 3
      %p269 = por %p267, %p268
      %p271 = scmp.ne.s32.totalorder %s254, %s270
      %p272 = scmp.eq.s32.totalorder %s30, 0
      %p273 = por %p271, %p272
      %s274 = ssub.s32 %s31, %s43
      %p275 = scmp.eq.s32.totalorder %s274, 0
      %s277 = sadd.s32 %s276, 1
      %s278 = scalar_select %p275, %s276, %s277
      %p281 = pneg %p275
      %p282 = scmp.eq.s32.totalorder %s24, 3
      %p283 = por %p281, %p282
      %p284 = scmp.ne.s32.totalorder %s276, %s279
      %p285 = scmp.eq.s32.totalorder %s24, 0
      %p286 = por %p284, %p285
      %p287 = scmp.ne.s32.totalorder %s276, %s279
      %p288 = scmp.eq.s32.totalorder %s29, 3
      %p289 = por %p287, %p288
      %p290 = scmp.ne.s32.totalorder %s279, %s280
      %p291 = scmp.eq.s32.totalorder %s29, 0
      %p292 = por %p290, %p291
      %p293 = scmp.ne.s32.totalorder %s279, %s280
      %p294 = scmp.eq.s32.totalorder %s30, 3
      %p295 = por %p293, %p294
      %p297 = scmp.ne.s32.totalorder %s280, %s296
      %p298 = scmp.eq.s32.totalorder %s30, 0
      %p299 = por %p297, %p298
      %s300 = ssub.s32 %s31, %s43
      %p301 = scmp.eq.s32.totalorder %s300, 0
      %s303 = sadd.s32 %s302, 1
      %s304 = scalar_select %p301, %s302, %s303
      %p307 = pneg %p301
      %p308 = scmp.eq.s32.totalorder %s24, 3
      %p309 = por %p307, %p308
      %p310 = scmp.ne.s32.totalorder %s302, %s305
      %p311 = scmp.eq.s32.totalorder %s24, 0
      %p312 = por %p310, %p311
      %p313 = scmp.ne.s32.totalorder %s302, %s305
      %p314 = scmp.eq.s32.totalorder %s29, 3
      %p315 = por %p313, %p314
      %p316 = scmp.ne.s32.totalorder %s305, %s306
      %p317 = scmp.eq.s32.totalorder %s29, 0
      %p318 = por %p316, %p317
      %p319 = scmp.ne.s32.totalorder %s305, %s306
      %p320 = scmp.eq.s32.totalorder %s30, 3
      %p321 = por %p319, %p320
      %p323 = scmp.ne.s32.totalorder %s306, %s322
      %p324 = scmp.eq.s32.totalorder %s30, 0
      %p325 = por %p323, %p324
      %p326 = scmp.le.s32.totalorder 1, %s24
      %p327 = scmp.lt.s32.totalorder %s24, 5
      %p328 = pnand %p326, %p327
      %p329 = pneg %p328
      // Predicated region
      $region9: #{tpu_custom_call.1} parent=5 // pred_check
        _
      $region10: #{tpu_custom_call.1} parent=5 // pred_check_branch
        %331 = sbr.rel (%p328) target = $region12
      $region11: #{tpu_custom_call.1} parent=5 // pred_region
        %s332 = ssub.s32 %s24, 1
        // Predicated region
        $region13: #{tpu_custom_call.1} parent=11 // pred_check
          %p333 = pneg %p62
        $region14: #{tpu_custom_call.1} parent=11 // pred_check_branch
          %335 = sbr.rel (%p333) target = $region16
        $region15: #{tpu_custom_call.1} parent=11 // pred_region
          %s337 = ssub.s32 128, 128
          %338 = vsyncadd [#allocation4], %s337
          %s339 = smul.addr %s33, 128
          %s340 = scalar_lea.hbm %s0, %s339
          %s342 = sshll.u32 [#allocation3], 4
          %s343 = int_to_ptr.vmem [resolvable:$true] %s342
          %345 = dma.hbm_to_vmem [thread:$0]  %s340, 128, %s343, [#allocation4]
        $region16: #{tpu_custom_call.1} parent=11 // pred_fallthru
          _
        // Predicated region
        $region17: #{tpu_custom_call.1} parent=11 // pred_check
          %p346 = pneg %p88
        $region18: #{tpu_custom_call.1} parent=11 // pred_check_branch
          %348 = sbr.rel (%p346) target = $region20
        $region19: #{tpu_custom_call.1} parent=11 // pred_region
          %s350 = ssub.s32 128, 128
          %351 = vsyncadd [#allocation7], %s350
          %s352 = smul.addr %s33, 128
          %s353 = scalar_lea.hbm %s1, %s352
          %s355 = sshll.u32 [#allocation6], 4
          %s356 = int_to_ptr.vmem [resolvable:$true] %s355
          %358 = dma.hbm_to_vmem [thread:$0]  %s353, 128, %s356, [#allocation7]
        $region20: #{tpu_custom_call.1} parent=11 // pred_fallthru
          _
        // Predicated region
        $region21: #{tpu_custom_call.1} parent=11 // pred_check
          %p359 = pneg %p114
        $region22: #{tpu_custom_call.1} parent=11 // pred_check_branch
          %361 = sbr.rel (%p359) target = $region24
        $region23: #{tpu_custom_call.1} parent=11 // pred_region
          %p362 = scmp.lt.s32.totalorder %s33, 0
          %s363 = scalar_select %p362, %s33, 0
          %s364 = smul.addr %s363, 4
          %s365 = scalar_lea.vmem %s2, %s364
        $region24: #{tpu_custom_call.1} parent=11 // pred_fallthru
          _
        // Predicated region
        $region25: #{tpu_custom_call.1} parent=11 // pred_check
          %p366 = pneg %p135
        $region26: #{tpu_custom_call.1} parent=11 // pred_check_branch
          %368 = sbr.rel (%p366) target = $region28
        $region27: #{tpu_custom_call.1} parent=11 // pred_region
          %s370 = ssub.s32 8192, 8192
          %371 = vsyncadd [#allocation7], %s370
          %s372 = sshll.u32 [#allocation8], 4
          %s373 = int_to_ptr.vmem [resolvable:$true] %s372
          %378 = dma.hbm_to_vmem [thread:$0]  %s3, 8192, %s373, [#allocation7], 64, 64, 4
        $region28: #{tpu_custom_call.1} parent=11 // pred_fallthru
          _
        // Predicated region
        $region29: #{tpu_custom_call.1} parent=11 // pred_check
          %p379 = pneg %p156
        $region30: #{tpu_custom_call.1} parent=11 // pred_check_branch
          %381 = sbr.rel (%p379) target = $region32
        $region31: #{tpu_custom_call.1} parent=11 // pred_region
          %s383 = ssub.s32 64, 64
          %384 = vsyncadd [#allocation10], %s383
          %s385 = sshll.u32 [#allocation9], 4
          %s386 = int_to_ptr.vmem [resolvable:$true] %s385
          %391 = dma.hbm_to_vmem [thread:$0]  %s4, 64, %s386, [#allocation10], 16, 16, 1
        $region32: #{tpu_custom_call.1} parent=11 // pred_fallthru
          _
        // Predicated region
        $region33: #{tpu_custom_call.1} parent=11 // pred_check
          %p392 = pneg %p177
        $region34: #{tpu_custom_call.1} parent=11 // pred_check_branch
          %394 = sbr.rel (%p392) target = $region36
        $region35: #{tpu_custom_call.1} parent=11 // pred_region
          %s396 = ssub.s32 4096, 4096
          %397 = vsyncadd [#allocation10], %s396
          %s398 = sshll.u32 [#allocation11], 4
          %s399 = int_to_ptr.vmem [resolvable:$true] %s398
          %404 = dma.hbm_to_vmem [thread:$0]  %s5, 4096, %s399, [#allocation10], 64, 64, 4
        $region36: #{tpu_custom_call.1} parent=11 // pred_fallthru
          _
        // Predicated region
        $region37: #{tpu_custom_call.1} parent=11 // pred_check
          %p405 = pneg %p198
        $region38: #{tpu_custom_call.1} parent=11 // pred_check_branch
          %407 = sbr.rel (%p405) target = $region40
        $region39: #{tpu_custom_call.1} parent=11 // pred_region
          _
        $region40: #{tpu_custom_call.1} parent=11 // pred_fallthru
          _
        // Predicated region
        $region41: #{tpu_custom_call.1} parent=11 // pred_check
          %p408 = pneg %p219
        $region42: #{tpu_custom_call.1} parent=11 // pred_check_branch
          %410 = sbr.rel (%p408) target = $region44
        $region43: #{tpu_custom_call.1} parent=11 // pred_region
          %s412 = ssub.s32 8192, 8192
          %413 = vsyncadd [#allocation13], %s412
          %s414 = sshll.u32 [#allocation12], 4
          %s415 = int_to_ptr.vmem [resolvable:$true] %s414
          %420 = dma.hbm_to_vmem [thread:$0]  %s7, 8192, %s415, [#allocation13], 128, 128, 8
        $region44: #{tpu_custom_call.1} parent=11 // pred_fallthru
          _
        // Predicated region
        $region45: #{tpu_custom_call.1} parent=11 // pred_check
          %p421 = pneg %p240
        $region46: #{tpu_custom_call.1} parent=11 // pred_check_branch
          %423 = sbr.rel (%p421) target = $region48
        $region47: #{tpu_custom_call.1} parent=11 // pred_region
          _
        $region48: #{tpu_custom_call.1} parent=11 // pred_fallthru
          _
      $region12: #{tpu_custom_call.1} parent=5 // pred_fallthru
        _
      %p424 = scmp.lt.s32.totalorder %s24, 4
      // Predicated region
      $region49: #{tpu_custom_call.1} parent=5 // pred_check
        %p425 = pneg %p424
      $region50: #{tpu_custom_call.1} parent=5 // pred_check_branch
        %427 = sbr.rel (%p425) target = $region52
      $region51: #{tpu_custom_call.1} parent=5 // pred_region
        _
      $region52: #{tpu_custom_call.1} parent=5 // pred_fallthru
        _
      %p428 = scmp.le.s32.totalorder 1, %s24
      %p429 = scmp.lt.s32.totalorder %s24, 5
      %p430 = pnand %p428, %p429
      %p431 = pneg %p430
      // Predicated region
      $region53: #{tpu_custom_call.1} parent=5 // pred_check
        _
      $region54: #{tpu_custom_call.1} parent=5 // pred_check_branch
        %433 = sbr.rel (%p430) target = $region56
      $region55: #{tpu_custom_call.1} parent=5 // pred_region
        %s434 = ssub.s32 %s24, 1
        // Predicated region
        $region57: #{tpu_custom_call.1} parent=55 // pred_check
          %p435 = pneg %p62
        $region58: #{tpu_custom_call.1} parent=55 // pred_check_branch
          %437 = sbr.rel (%p435) target = $region60
        $region59: #{tpu_custom_call.1} parent=55 // pred_region
          %438 = dma.done [#allocation4], 128
        $region60: #{tpu_custom_call.1} parent=55 // pred_fallthru
          _
        // Predicated region
        $region61: #{tpu_custom_call.1} parent=55 // pred_check
          %p439 = pneg %p88
        $region62: #{tpu_custom_call.1} parent=55 // pred_check_branch
          %441 = sbr.rel (%p439) target = $region64
        $region63: #{tpu_custom_call.1} parent=55 // pred_region
          %442 = dma.done [#allocation7], 128
        $region64: #{tpu_custom_call.1} parent=55 // pred_fallthru
          _
        // Predicated region
        $region65: #{tpu_custom_call.1} parent=55 // pred_check
          %p443 = pneg %p135
        $region66: #{tpu_custom_call.1} parent=55 // pred_check_branch
          %445 = sbr.rel (%p443) target = $region68
        $region67: #{tpu_custom_call.1} parent=55 // pred_region
          %446 = dma.done [#allocation7], 8192
        $region68: #{tpu_custom_call.1} parent=55 // pred_fallthru
          _
        // Predicated region
        $region69: #{tpu_custom_call.1} parent=55 // pred_check
          %p447 = pneg %p156
        $region70: #{tpu_custom_call.1} parent=55 // pred_check_branch
          %449 = sbr.rel (%p447) target = $region72
        $region71: #{tpu_custom_call.1} parent=55 // pred_region
          %450 = dma.done [#allocation10], 64
        $region72: #{tpu_custom_call.1} parent=55 // pred_fallthru
          _
        // Predicated region
        $region73: #{tpu_custom_call.1} parent=55 // pred_check
          %p451 = pneg %p177
        $region74: #{tpu_custom_call.1} parent=55 // pred_check_branch
          %453 = sbr.rel (%p451) target = $region76
        $region75: #{tpu_custom_call.1} parent=55 // pred_region
          %454 = dma.done [#allocation10], 4096
        $region76: #{tpu_custom_call.1} parent=55 // pred_fallthru
          _
        // Predicated region
        $region77: #{tpu_custom_call.1} parent=55 // pred_check
          %p455 = pneg %p219
        $region78: #{tpu_custom_call.1} parent=55 // pred_check_branch
          %457 = sbr.rel (%p455) target = $region80
        $region79: #{tpu_custom_call.1} parent=55 // pred_region
          %458 = dma.done [#allocation13], 8192
        $region80: #{tpu_custom_call.1} parent=55 // pred_fallthru
          _
        %p459 = pneg %p62
        %p460 = pneg %p59
        %p461 = pneg %p88
        %p462 = pneg %p85
        %p463 = scmp.lt.s32.totalorder %s33, 0
        %s464 = scalar_select %p463, %s33, 0
        %s465 = smul.addr %s464, 4
        %s466 = scalar_lea.vmem %s2, %s465
        %p467 = pneg %p114
        %p468 = pneg %p111
        %p469 = pneg %p135
        %p470 = pneg %p132
        %p471 = pneg %p156
        %p472 = pneg %p153
        %p473 = pneg %p177
        %p474 = pneg %p174
        %p475 = pneg %p198
        %p476 = pneg %p195
        %p477 = pneg %p219
        %p478 = pneg %p216
        %p479 = pneg %p240
        %p480 = pneg %p237
        %p481 = pneg %p266
        %p482 = pneg %p263
        %p483 = pneg %p292
        %p484 = pneg %p289
        %p485 = pneg %p318
        %p486 = pneg %p315
        %p487 = scmp.lt.s32.totalorder %s33, 0
        %s488 = scalar_select %p487, %s33, 0
        %s489 = smul.addr %s488, 4
        %s490 = scalar_lea.vmem %s2, %s489
        %p492 = scmp.eq.s32.totalorder %s34, 0
        // Predicated region
        $region81: #{tpu_custom_call.1} parent=55 // pred_check
          %p493 = pneg %p492
        $region82: #{tpu_custom_call.1} parent=55 // pred_check_branch
          %495 = sbr.rel (%p493) target = $region84
        $region83: #{tpu_custom_call.1} parent=55 // pred_region
          %v496 = vld [vmem:[#allocation3] sm:$0xff]
          %497 = vst [vmem:[#allocation14] sm:$0xff] %v496
          %v498 = vld [vmem:[#allocation6] sm:$0xff]
          %499 = vst [vmem:[#allocation15] sm:$0xff] %v498
          %500 = vst [vmem:[#allocation17] sm:$0xff] 0.0
          %v501 = vld [vmem:[%s490] sm:$0xf]
          %502 = vst [vmem:[#allocation2 + $0x4] sm:$0xf] %v501
        $region84: #{tpu_custom_call.1} parent=55 // pred_fallthru
          _
        %v503 = vld [vmem:[#allocation14] sm:$0xff]
        %v504 = vld [vmem:[#allocation15] sm:$0xff]
        %v505 = vpack.c.bf16 %v503, %v503
        %506 = vst [vmem:[#allocation2] sm:$0xf] %v505
        %v507 = vld [vmem:[#allocation2] sm:$0xff]
        %s508 = smul.u32 %s34, 32
        %s509 = smul.addr %s508, 4
        %s510 = scalar_lea.vmem [#allocation8], %s509
        %v511 = vld [vmem:[%s510] sm:$0xf]
        %v512 = vld [vmem:[%s510 + $0x4] sm:$0xf]
        %v513 = vld [vmem:[%s510 + $0x8] sm:$0xf]
        %v514 = vld [vmem:[%s510 + $0xc] sm:$0xf]
        %v515 = vld [vmem:[%s510 + $0x10] sm:$0xf]
        %v516 = vld [vmem:[%s510 + $0x14] sm:$0xf]
        %v517 = vld [vmem:[%s510 + $0x18] sm:$0xf]
        %v518 = vld [vmem:[%s510 + $0x1c] sm:$0xf]
        %v519 = vld [vmem:[%s510 + $0x20] sm:$0xf]
        %v520 = vld [vmem:[%s510 + $0x24] sm:$0xf]
        %v521 = vld [vmem:[%s510 + $0x28] sm:$0xf]
        %v522 = vld [vmem:[%s510 + $0x2c] sm:$0xf]
        %v523 = vld [vmem:[%s510 + $0x30] sm:$0xf]
        %v524 = vld [vmem:[%s510 + $0x34] sm:$0xf]
        %v525 = vld [vmem:[%s510 + $0x38] sm:$0xf]
        %v526 = vld [vmem:[%s510 + $0x3c] sm:$0xf]
        %v527 = vld [vmem:[%s510 + $0x40] sm:$0xf]
        %v528 = vld [vmem:[%s510 + $0x44] sm:$0xf]
        %v529 = vld [vmem:[%s510 + $0x48] sm:$0xf]
        %v530 = vld [vmem:[%s510 + $0x4c] sm:$0xf]
        %v531 = vld [vmem:[%s510 + $0x50] sm:$0xf]
        %v532 = vld [vmem:[%s510 + $0x54] sm:$0xf]
        %v533 = vld [vmem:[%s510 + $0x58] sm:$0xf]
        %v534 = vld [vmem:[%s510 + $0x5c] sm:$0xf]
        %v535 = vld [vmem:[%s510 + $0x60] sm:$0xf]
        %v536 = vld [vmem:[%s510 + $0x64] sm:$0xf]
        %v537 = vld [vmem:[%s510 + $0x68] sm:$0xf]
        %v538 = vld [vmem:[%s510 + $0x6c] sm:$0xf]
        %v539 = vld [vmem:[%s510 + $0x70] sm:$0xf]
        %v540 = vld [vmem:[%s510 + $0x74] sm:$0xf]
        %v541 = vld [vmem:[%s510 + $0x78] sm:$0xf]
        %v542 = vld [vmem:[%s510 + $0x7c] sm:$0xf]
        %s543 = scalar_lea.vmem [#allocation9], %s34
        %v544 = vld [vmem:[%s543] sm:$0x1]
        %v546 = vlaneseq
        %v547 = vshrl.u32 %v546, 7
        %v548 = vsub.s32 0, %v547
        %v549 = vrot.slane %v544, %v548
        %v552 = vunpack.c.l.b16 %v507
        %v553 = vunpack.c.h.b16 %v507
        %v554 = vpack.c.b16 %v552, %v552
        %v555 = vpack.c.b16 %v553, %v553
        %v590 = vunpack.c.l.b16 %v511
        %v591 = vunpack.c.l.b16 %v512
        %v592 = vunpack.c.l.b16 %v513
        %v593 = vunpack.c.l.b16 %v514
        %v594 = vunpack.c.l.b16 %v515
        %v595 = vunpack.c.l.b16 %v516
        %v596 = vunpack.c.l.b16 %v517
        %v597 = vunpack.c.l.b16 %v518
        %v598 = vunpack.c.l.b16 %v519
        %v599 = vunpack.c.l.b16 %v520
        %v600 = vunpack.c.l.b16 %v521
        %v601 = vunpack.c.l.b16 %v522
        %v602 = vunpack.c.l.b16 %v523
        %v603 = vunpack.c.l.b16 %v524
        %v604 = vunpack.c.l.b16 %v525
        %v605 = vunpack.c.l.b16 %v526
        %v606 = vunpack.c.l.b16 %v527
        %v607 = vunpack.c.l.b16 %v528
        %v608 = vunpack.c.l.b16 %v529
        %v609 = vunpack.c.l.b16 %v530
        %v610 = vunpack.c.l.b16 %v531
        %v611 = vunpack.c.l.b16 %v532
        %v612 = vunpack.c.l.b16 %v533
        %v613 = vunpack.c.l.b16 %v534
        %v614 = vunpack.c.l.b16 %v535
        %v615 = vunpack.c.l.b16 %v536
        %v616 = vunpack.c.l.b16 %v537
        %v617 = vunpack.c.l.b16 %v538
        %v618 = vunpack.c.l.b16 %v539
        %v619 = vunpack.c.l.b16 %v540
        %v620 = vunpack.c.l.b16 %v541
        %v621 = vunpack.c.l.b16 %v542
        %v622 = vpack.c.b16 %v591, %v590
        %v623 = vpack.c.b16 %v593, %v592
        %v624 = vpack.c.b16 %v595, %v594
        %v625 = vpack.c.b16 %v597, %v596
        %v626 = vpack.c.b16 %v599, %v598
        %v627 = vpack.c.b16 %v601, %v600
        %v628 = vpack.c.b16 %v603, %v602
        %v629 = vpack.c.b16 %v605, %v604
        %v630 = vpack.c.b16 %v607, %v606
        %v631 = vpack.c.b16 %v609, %v608
        %v632 = vpack.c.b16 %v611, %v610
        %v633 = vpack.c.b16 %v613, %v612
        %v634 = vpack.c.b16 %v615, %v614
        %v635 = vpack.c.b16 %v617, %v616
        %v636 = vpack.c.b16 %v619, %v618
        %v637 = vpack.c.b16 %v621, %v620
        %654 = vmatprep.subr.bf16.mxu0 0
        %655 = vmatpush1.bf16.msra.mxu0 %v622
        %656 = vmatprep.subr.bf16.mxu0 0
        %657 = vmatpush1.bf16.msra.mxu0 %v623
        %658 = vmatprep.subr.bf16.mxu0 0
        %659 = vmatpush1.bf16.msra.mxu0 %v624
        %660 = vmatprep.subr.bf16.mxu0 0
        %661 = vmatpush1.bf16.msra.mxu0 %v625
        %662 = vmatprep.subr.bf16.mxu0 0
        %663 = vmatpush1.bf16.msra.mxu0 %v626
        %664 = vmatprep.subr.bf16.mxu0 0
        %665 = vmatpush1.bf16.msra.mxu0 %v627
        %666 = vmatprep.subr.bf16.mxu0 0
        %667 = vmatpush1.bf16.msra.mxu0 %v628
        %668 = vmatprep.subr.bf16.mxu0 0
        %669 = vmatpush1.bf16.msra.mxu0 %v629
        %670 = vmatprep.subr.bf16.mxu0 0
        %671 = vmatpush1.bf16.msra.mxu0 %v630
        %672 = vmatprep.subr.bf16.mxu0 0
        %673 = vmatpush1.bf16.msra.mxu0 %v631
        %674 = vmatprep.subr.bf16.mxu0 0
        %675 = vmatpush1.bf16.msra.mxu0 %v632
        %676 = vmatprep.subr.bf16.mxu0 0
        %677 = vmatpush1.bf16.msra.mxu0 %v633
        %678 = vmatprep.subr.bf16.mxu0 0
        %679 = vmatpush1.bf16.msra.mxu0 %v634
        %680 = vmatprep.subr.bf16.mxu0 0
        %681 = vmatpush1.bf16.msra.mxu0 %v635
        %682 = vmatprep.subr.bf16.mxu0 0
        %683 = vmatpush1.bf16.msra.mxu0 %v636
        %684 = vmatprep.subr.bf16.mxu0 0
        %685 = vmatpush1.bf16.msra.mxu0 %v637
        %686 = vmatprep.mubr.bf16.mxu0 %v555
        %687 = vmatmul.mubr.bf16.gmra.mrb[0].mxu0 %v554
        %v688 = vpop.f32.mrb[0].mxu0
        %v689 = vadd.f32 %v549, %v688
        %v690 = vpop.f32.mrb[0].mxu0
        %v691 = vpop.f32.mrb[0].mxu0
        %v692 = vpop.f32.mrb[0].mxu0
        %693 = vdwg.mxu0
        %v694 = vmax.f32 %v689, 0.0
        %v695 = vpack.c.bf16 %v694, %v694
        %s696 = smul.u32 %s34, 16
        %s697 = smul.addr %s696, 4
        %s698 = scalar_lea.vmem [#allocation11], %s697
        %v699 = vld [vmem:[%s698] sm:$0xf]
        %v700 = vld [vmem:[%s698 + $0x4] sm:$0xf]
        %v701 = vld [vmem:[%s698 + $0x8] sm:$0xf]
        %v702 = vld [vmem:[%s698 + $0xc] sm:$0xf]
        %v703 = vld [vmem:[%s698 + $0x10] sm:$0xf]
        %v704 = vld [vmem:[%s698 + $0x14] sm:$0xf]
        %v705 = vld [vmem:[%s698 + $0x18] sm:$0xf]
        %v706 = vld [vmem:[%s698 + $0x1c] sm:$0xf]
        %v707 = vld [vmem:[%s698 + $0x20] sm:$0xf]
        %v708 = vld [vmem:[%s698 + $0x24] sm:$0xf]
        %v709 = vld [vmem:[%s698 + $0x28] sm:$0xf]
        %v710 = vld [vmem:[%s698 + $0x2c] sm:$0xf]
        %v711 = vld [vmem:[%s698 + $0x30] sm:$0xf]
        %v712 = vld [vmem:[%s698 + $0x34] sm:$0xf]
        %v713 = vld [vmem:[%s698 + $0x38] sm:$0xf]
        %v714 = vld [vmem:[%s698 + $0x3c] sm:$0xf]
        %s715 = scalar_lea.vmem %s6, %s34
        %v716 = vld [vmem:[%s715] sm:$0x1]
        %v718 = vlaneseq
        %v719 = vshrl.u32 %v718, 7
        %v720 = vsub.s32 0, %v719
        %v721 = vrot.slane %v716, %v720
        %v739 = vunpack.c.l.b16 %v699
        %v740 = vunpack.c.l.b16 %v700
        %v741 = vunpack.c.l.b16 %v701
        %v742 = vunpack.c.l.b16 %v702
        %v743 = vunpack.c.l.b16 %v703
        %v744 = vunpack.c.l.b16 %v704
        %v745 = vunpack.c.l.b16 %v705
        %v746 = vunpack.c.l.b16 %v706
        %v747 = vunpack.c.l.b16 %v707
        %v748 = vunpack.c.l.b16 %v708
        %v749 = vunpack.c.l.b16 %v709
        %v750 = vunpack.c.l.b16 %v710
        %v751 = vunpack.c.l.b16 %v711
        %v752 = vunpack.c.l.b16 %v712
        %v753 = vunpack.c.l.b16 %v713
        %v754 = vunpack.c.l.b16 %v714
        %v755 = vpack.c.b16 %v740, %v739
        %v756 = vpack.c.b16 %v742, %v741
        %v757 = vpack.c.b16 %v744, %v743
        %v758 = vpack.c.b16 %v746, %v745
        %v759 = vpack.c.b16 %v748, %v747
        %v760 = vpack.c.b16 %v750, %v749
        %v761 = vpack.c.b16 %v752, %v751
        %v762 = vpack.c.b16 %v754, %v753
        %771 = vmatprep.subr.bf16.mxu0 0
        %772 = vmatpush1.bf16.msra.mxu0 %v755
        %773 = vmatprep.subr.bf16.mxu0 0
        %774 = vmatpush1.bf16.msra.mxu0 %v756
        %775 = vmatprep.subr.bf16.mxu0 0
        %776 = vmatpush1.bf16.msra.mxu0 %v757
        %777 = vmatprep.subr.bf16.mxu0 0
        %778 = vmatpush1.bf16.msra.mxu0 %v758
        %779 = vmatprep.subr.bf16.mxu0 0
        %780 = vmatpush1.bf16.msra.mxu0 %v759
        %781 = vmatprep.subr.bf16.mxu0 0
        %782 = vmatpush1.bf16.msra.mxu0 %v760
        %783 = vmatprep.subr.bf16.mxu0 0
        %784 = vmatpush1.bf16.msra.mxu0 %v761
        %785 = vmatprep.subr.bf16.mxu0 0
        %786 = vmatpush1.bf16.msra.mxu0 %v762
        %787 = vmatprep.subr.bf16.mxu0 0
        %788 = vmatpush1.bf16.msra.mxu0 0
        %789 = vmatprep.subr.bf16.mxu0 0
        %790 = vmatpush1.bf16.msra.mxu0 0
        %791 = vmatprep.subr.bf16.mxu0 0
        %792 = vmatpush1.bf16.msra.mxu0 0
        %793 = vmatprep.subr.bf16.mxu0 0
        %794 = vmatpush1.bf16.msra.mxu0 0
        %795 = vmatprep.subr.bf16.mxu0 0
        %796 = vmatpush1.bf16.msra.mxu0 0
        %797 = vmatprep.subr.bf16.mxu0 0
        %798 = vmatpush1.bf16.msra.mxu0 0
        %799 = vmatprep.subr.bf16.mxu0 0
        %800 = vmatpush1.bf16.msra.mxu0 0
        %801 = vmatprep.subr.bf16.mxu0 0
        %802 = vmatpush1.bf16.msra.mxu0 0
        %803 = vmatprep.mubr.bf16.mxu0 0
        %804 = vmatmul.mubr.bf16.gmra.mrb[0].mxu0 %v695
        %v805 = vpop.f32.mrb[0].mxu0
        %v806 = vadd.f32 %v721, %v805
        %v807 = vpop.f32.mrb[0].mxu0
        %v808 = vpop.f32.mrb[0].mxu0
        %v809 = vpop.f32.mrb[0].mxu0
        %810 = vdwg.mxu0
        %v811 = vmax.f32 %v806, 0.0
        %v812 = vpack.c.bf16 %v811, %v811
        %s813 = smul.addr %s508, 4
        %s814 = scalar_lea.vmem [#allocation12], %s813
        %v815 = vld [vmem:[%s814] sm:$0xff]
        %v816 = vld [vmem:[%s814 + $0x8] sm:$0xff]
        %v817 = vld [vmem:[%s814 + $0x10] sm:$0xff]
        %v818 = vld [vmem:[%s814 + $0x18] sm:$0xff]
        %v819 = vld [vmem:[%s814 + $0x20] sm:$0xff]
        %v820 = vld [vmem:[%s814 + $0x28] sm:$0xff]
        %v821 = vld [vmem:[%s814 + $0x30] sm:$0xff]
        %v822 = vld [vmem:[%s814 + $0x38] sm:$0xff]
        %v823 = vld [vmem:[%s814 + $0x40] sm:$0xff]
        %v824 = vld [vmem:[%s814 + $0x48] sm:$0xff]
        %v825 = vld [vmem:[%s814 + $0x50] sm:$0xff]
        %v826 = vld [vmem:[%s814 + $0x58] sm:$0xff]
        %v827 = vld [vmem:[%s814 + $0x60] sm:$0xff]
        %v828 = vld [vmem:[%s814 + $0x68] sm:$0xff]
        %v829 = vld [vmem:[%s814 + $0x70] sm:$0xff]
        %v830 = vld [vmem:[%s814 + $0x78] sm:$0xff]
        %s831 = smul.u32 %s34, 2
        %s832 = scalar_lea.vmem %s8, %s831
        %v833 = vld [vmem:[%s832] sm:$0x3]
        %v835 = vlaneseq
        %v836 = vshrl.u32 %v835, 7
        %v837 = vsub.s32 0, %v836
        %v838 = vrot.slane %v833, %v837
        %v839 = vlaneseq
        %v840 = vshrl.u32 %v839, 7
        %v841 = vsub.s32 1, %v840
        %v842 = vrot.slane %v833, %v841
        %v861 = vunpack.c.l.b16 %v815
        %v862 = vunpack.c.h.b16 %v815
        %v863 = vunpack.c.l.b16 %v816
        %v864 = vunpack.c.h.b16 %v816
        %v865 = vunpack.c.l.b16 %v817
        %v866 = vunpack.c.h.b16 %v817
        %v867 = vunpack.c.l.b16 %v818
        %v868 = vunpack.c.h.b16 %v818
        %v869 = vunpack.c.l.b16 %v819
        %v870 = vunpack.c.h.b16 %v819
        %v871 = vunpack.c.l.b16 %v820
        %v872 = vunpack.c.h.b16 %v820
        %v873 = vunpack.c.l.b16 %v821
        %v874 = vunpack.c.h.b16 %v821
        %v875 = vunpack.c.l.b16 %v822
        %v876 = vunpack.c.h.b16 %v822
        %v877 = vunpack.c.l.b16 %v823
        %v878 = vunpack.c.h.b16 %v823
        %v879 = vunpack.c.l.b16 %v824
        %v880 = vunpack.c.h.b16 %v824
        %v881 = vunpack.c.l.b16 %v825
        %v882 = vunpack.c.h.b16 %v825
        %v883 = vunpack.c.l.b16 %v826
        %v884 = vunpack.c.h.b16 %v826
        %v885 = vunpack.c.l.b16 %v827
        %v886 = vunpack.c.h.b16 %v827
        %v887 = vunpack.c.l.b16 %v828
        %v888 = vunpack.c.h.b16 %v828
        %v889 = vunpack.c.l.b16 %v829
        %v890 = vunpack.c.h.b16 %v829
        %v891 = vunpack.c.l.b16 %v830
        %v892 = vunpack.c.h.b16 %v830
        %v893 = vpack.c.b16 %v863, %v861
        %v894 = vpack.c.b16 %v864, %v862
        %v895 = vpack.c.b16 %v867, %v865
        %v896 = vpack.c.b16 %v868, %v866
        %v897 = vpack.c.b16 %v871, %v869
        %v898 = vpack.c.b16 %v872, %v870
        %v899 = vpack.c.b16 %v875, %v873
        %v900 = vpack.c.b16 %v876, %v874
        %v901 = vpack.c.b16 %v879, %v877
        %v902 = vpack.c.b16 %v880, %v878
        %v903 = vpack.c.b16 %v883, %v881
        %v904 = vpack.c.b16 %v884, %v882
        %v905 = vpack.c.b16 %v887, %v885
        %v906 = vpack.c.b16 %v888, %v886
        %v907 = vpack.c.b16 %v891, %v889
        %v908 = vpack.c.b16 %v892, %v890
        %925 = vmatprep.subr.bf16.mxu0 %v894
        %926 = vmatpush1.bf16.msra.mxu0 %v893
        %927 = vmatprep.subr.bf16.mxu0 %v896
        %928 = vmatpush1.bf16.msra.mxu0 %v895
        %929 = vmatprep.subr.bf16.mxu0 %v898
        %930 = vmatpush1.bf16.msra.mxu0 %v897
        %931 = vmatprep.subr.bf16.mxu0 %v900
        %932 = vmatpush1.bf16.msra.mxu0 %v899
        %933 = vmatprep.subr.bf16.mxu0 %v902
        %934 = vmatpush1.bf16.msra.mxu0 %v901
        %935 = vmatprep.subr.bf16.mxu0 %v904
        %936 = vmatpush1.bf16.msra.mxu0 %v903
        %937 = vmatprep.subr.bf16.mxu0 %v906
        %938 = vmatpush1.bf16.msra.mxu0 %v905
        %939 = vmatprep.subr.bf16.mxu0 %v908
        %940 = vmatpush1.bf16.msra.mxu0 %v907
        %941 = vmatprep.subr.bf16.mxu0 0
        %942 = vmatpush1.bf16.msra.mxu0 0
        %943 = vmatprep.subr.bf16.mxu0 0
        %944 = vmatpush1.bf16.msra.mxu0 0
        %945 = vmatprep.subr.bf16.mxu0 0
        %946 = vmatpush1.bf16.msra.mxu0 0
        %947 = vmatprep.subr.bf16.mxu0 0
        %948 = vmatpush1.bf16.msra.mxu0 0
        %949 = vmatprep.subr.bf16.mxu0 0
        %950 = vmatpush1.bf16.msra.mxu0 0
        %951 = vmatprep.subr.bf16.mxu0 0
        %952 = vmatpush1.bf16.msra.mxu0 0
        %953 = vmatprep.subr.bf16.mxu0 0
        %954 = vmatpush1.bf16.msra.mxu0 0
        %955 = vmatprep.subr.bf16.mxu0 0
        %956 = vmatpush1.bf16.msra.mxu0 0
        %957 = vmatprep.mubr.bf16.mxu0 0
        %958 = vmatmul.mubr.bf16.gmra.mrb[0].mxu0 %v812
        %v959 = vpop.f32.mrb[0].mxu0
        %v960 = vadd.f32 %v838, %v959
        %v961 = vpop.f32.mrb[0].mxu0
        %v962 = vadd.f32 %v842, %v961
        %v963 = vpop.f32.mrb[0].mxu0
        %v964 = vpop.f32.mrb[0].mxu0
        %965 = vdwg.mxu0
        %v966 = vtanh.pop %v960
        %v967 = vmul.f32 %v966, 1.442695
        %v968 = vpow.pop %v967
        %v969 = vmul.f32 %v968, %v504
        %v970 = vadd.f32 %v969, %v962
        %971 = vst [vmem:[#allocation14] sm:$0xff] %v970
        %972 = vst [vmem:[#allocation15] sm:$0xff] %v503
        %v973 = vld [vmem:[#allocation17] sm:$0xff]
        %v974 = vadd.f32 %v973, %v966
        %975 = vst [vmem:[#allocation17] sm:$0xff] %v974
        // Predicated region
        $region85: #{tpu_custom_call.1} parent=55 // pred_check
          %p976 = pneg %p263
        $region86: #{tpu_custom_call.1} parent=55 // pred_check_branch
          %978 = sbr.rel (%p976) target = $region88
        $region87: #{tpu_custom_call.1} parent=55 // pred_region
          %s980 = ssub.s32 128, 128
          %981 = vsyncadd [#allocation5], %s980
          %s982 = smul.addr %s33, 128
          %s983 = scalar_lea.hbm %s9, %s982
          %s985 = sshll.u32 [#allocation14], 4
          %s986 = int_to_ptr.vmem [resolvable:$true] %s985
          %988 = dma.vmem_to_hbm [thread:$0]  %s986, 128, %s983, [#allocation5]
        $region88: #{tpu_custom_call.1} parent=55 // pred_fallthru
          _
        // Predicated region
        $region89: #{tpu_custom_call.1} parent=55 // pred_check
          %p989 = pneg %p289
        $region90: #{tpu_custom_call.1} parent=55 // pred_check_branch
          %991 = sbr.rel (%p989) target = $region92
        $region91: #{tpu_custom_call.1} parent=55 // pred_region
          %s993 = ssub.s32 128, 128
          %994 = vsyncadd [#allocation16], %s993
          %s995 = smul.addr %s33, 128
          %s996 = scalar_lea.hbm %s10, %s995
          %s998 = sshll.u32 [#allocation15], 4
          %s999 = int_to_ptr.vmem [resolvable:$true] %s998
          %1001 = dma.vmem_to_hbm [thread:$0]  %s999, 128, %s996, [#allocation16]
        $region92: #{tpu_custom_call.1} parent=55 // pred_fallthru
          _
        // Predicated region
        $region93: #{tpu_custom_call.1} parent=55 // pred_check
          %p1002 = pneg %p315
        $region94: #{tpu_custom_call.1} parent=55 // pred_check_branch
          %1004 = sbr.rel (%p1002) target = $region96
        $region95: #{tpu_custom_call.1} parent=55 // pred_region
          %s1006 = ssub.s32 128, 128
          %1007 = vsyncadd [#allocation16], %s1006
          %s1008 = smul.addr %s33, 128
          %s1009 = scalar_lea.hbm %s11, %s1008
          %s1011 = sshll.u32 [#allocation17], 4
          %s1012 = int_to_ptr.vmem [resolvable:$true] %s1011
          %1014 = dma.vmem_to_hbm [thread:$0]  %s1012, 128, %s1009, [#allocation16]
        $region96: #{tpu_custom_call.1} parent=55 // pred_fallthru
          _
        // Predicated region
        $region97: #{tpu_custom_call.1} parent=55 // pred_check
          %p1015 = pneg %p263
        $region98: #{tpu_custom_call.1} parent=55 // pred_check_branch
          %1017 = sbr.rel (%p1015) target = $region100
        $region99: #{tpu_custom_call.1} parent=55 // pred_region
          %1018 = dma.done [#allocation5], 128
        $region100: #{tpu_custom_call.1} parent=55 // pred_fallthru
          _
        // Predicated region
        $region101: #{tpu_custom_call.1} parent=55 // pred_check
          %p1019 = pneg %p289
        $region102: #{tpu_custom_call.1} parent=55 // pred_check_branch
          %1021 = sbr.rel (%p1019) target = $region104
        $region103: #{tpu_custom_call.1} parent=55 // pred_region
          %1022 = dma.done [#allocation16], 128
        $region104: #{tpu_custom_call.1} parent=55 // pred_fallthru
          _
        // Predicated region
        $region105: #{tpu_custom_call.1} parent=55 // pred_check
          %p1023 = pneg %p315
        $region106: #{tpu_custom_call.1} parent=55 // pred_check_branch
          %1025 = sbr.rel (%p1023) target = $region108
        $region107: #{tpu_custom_call.1} parent=55 // pred_region
          %1026 = dma.done [#allocation16], 128
        $region108: #{tpu_custom_call.1} parent=55 // pred_fallthru
          _
      $region56: #{tpu_custom_call.1} parent=5 // pred_fallthru
        _
      %p1027 = scmp.le.s32.totalorder 2, %s24
      // Predicated region
      $region109: #{tpu_custom_call.1} parent=5 // pred_check
        %p1028 = pneg %p1027
      $region110: #{tpu_custom_call.1} parent=5 // pred_check_branch
        %1030 = sbr.rel (%p1028) target = $region112
      $region111: #{tpu_custom_call.1} parent=5 // pred_region
        %s1031 = ssub.s32 %s24, 2
      $region112: #{tpu_custom_call.1} parent=5 // pred_fallthru
        _
    $region6: #{tpu_custom_call.1} parent=1 // loop_footer
      %s28 = sadd.s32 1, %s24
    $region7: #{tpu_custom_call.1} parent=1 // loop_footer_branch
      %23 = sbr.rel target = $region3
    $region8: #{tpu_custom_call.1} parent=1 // loop_exit
      _
    %1032 = vsyncpa [#allocation4], 1
    %s1033 = scalar_lea.sflag [#allocation4], 1
    %1034 = vsyncpa %s1033, 1
    %1035 = vsyncpa [#allocation7], 1
    %1036 = vsyncpa [#allocation10], 1
    %1037 = vsyncpa [#allocation13], 1
    %1038 = vsyncpa [#allocation5], 1
    %s1039 = scalar_lea.sflag [#allocation5], 1
    %1040 = vsyncpa %s1039, 1
    %1041 = vsyncpa [#allocation16], 1

</llo_original>
